<compile_context>
chip_gen: v7x
topology: tpu7x:2x2x1
jax: 0.10.0
libtpu: 0.0.40
codegen_flags: <defaults>
</compile_context>

<pallas_src>
import functools

import jax
import jax.numpy as jnp
from jax.experimental import pallas as pl
from jax.experimental.pallas import tpu as pltpu


def _round_up(x, m):
    return (x + m - 1) // m * m


def _gather_rows(idx_s_ref, table_ref, logits_ref, base, tile_rows):
    """logits_ref[r, :] = table_ref[idx[base + r], :] for r in [0, tile_rows).

    idx lives in SMEM (scalar prefetch); the table is resident in VMEM.
    Unrolled 8 rows per fori_loop iteration so loads/stores can co-issue.
    """
    def body(k, carry):
        r0 = pl.multiple_of(k * 8, 8)
        for u in range(8):                       # static unroll
            r = r0 + u
            row_id = idx_s_ref[base + r]
            logits_ref[pl.ds(r, 1), :] = table_ref[pl.ds(row_id, 1), :]
        return carry

    jax.lax.fori_loop(0, tile_rows // 8, body, 0)


def _bigram_train_kernel(idx_s_ref, tgt_ref, table_ref,
                         logits_ref, loss_ref, acc_ref,
                         *, tile_rows, n_valid):
    i = pl.program_id(0)

    @pl.when(i == 0)
    def _init():
        acc_ref[0, 0] = jnp.float32(0.0)

    base = i * tile_rows

    # Embedding lookup: gather table rows straight into the logits output tile.
    _gather_rows(idx_s_ref, table_ref, logits_ref, base, tile_rows)

    # Cross entropy on the gathered tile (f32 throughout, no logp tensor).
    logits = logits_ref[...]                                    # (tile, Vp) f32
    vp = logits.shape[-1]
    m = jnp.max(logits, axis=-1, keepdims=True)                 # (tile, 1)
    lse = m + jnp.log(jnp.sum(jnp.exp(logits - m), axis=-1, keepdims=True))
    col = jax.lax.broadcasted_iota(jnp.int32, (tile_rows, vp), 1)
    tgt = tgt_ref[...]                                          # (tile, 1) i32
    tgt_logit = jnp.sum(jnp.where(col == tgt, logits, 0.0),
                        axis=-1, keepdims=True)                 # (tile, 1)
    nll = lse - tgt_logit                                       # (tile, 1)

    if n_valid % tile_rows != 0:                                # mask padded rows
        rows = base + jax.lax.broadcasted_iota(jnp.int32, (tile_rows, 1), 0)
        nll = jnp.where(rows < n_valid, nll, 0.0)

    acc_ref[0, 0] += jnp.sum(nll)

    @pl.when(i == pl.num_programs(0) - 1)
    def _finalize():
        loss_ref[0, 0] = acc_ref[0, 0] * jnp.float32(1.0 / n_valid)


def _bigram_infer_kernel(idx_s_ref, table_ref, logits_ref, *, tile_rows):
    base = pl.program_id(0) * tile_rows
    _gather_rows(idx_s_ref, table_ref, logits_ref, base, tile_rows)


def bigram_forward(idx, token_table, targets=None, *, block_rows=512):
    """Pallas equivalent of BiagramModel.forward: returns (logits, loss)."""
    B, T = idx.shape
    V = token_table.shape[0]
    N = B * T

    vp = _round_up(V, 128)     # lane-dense logits width
    vr = _round_up(V, 8)       # sublane-aligned table rows (padded rows never gathered)

    if N <= block_rows:
        tile_rows = _round_up(N, 8)
    else:
        tile_rows = block_rows
    assert tile_rows % 8 == 0
    n_pad = _round_up(N, tile_rows)
    grid = (n_pad // tile_rows,)

    # Padded table columns hold -1e30 so they never affect the row max / lse and
    # exp() underflows to 0 for them; padded logits columns are sliced off below.
    table_p = jnp.pad(token_table.astype(jnp.float32),
                      ((0, vr - V), (0, vp - V)), constant_values=-1e30)

    # Token ids go to SMEM via scalar prefetch (they feed the gather).
    idx_flat = jnp.pad(idx.reshape(-1).astype(jnp.int32), (0, n_pad - N))

    table_spec = pl.BlockSpec((vr, vp), lambda i, idx_s: (0, 0))      # resident
    logits_spec = pl.BlockSpec((tile_rows, vp), lambda i, idx_s: (i, 0))
    logits_shape = jax.ShapeDtypeStruct((n_pad, vp), jnp.float32)

    if targets is None:
        # Logits-only kernel: no CE work, grid axis fully parallel (v7x: 2 TCs).
        kernel = functools.partial(_bigram_infer_kernel, tile_rows=tile_rows)
        cost = pl.CostEstimate(
            flops=0,
            transcendentals=0,
            bytes_accessed=n_pad * vp * 4 + vr * vp * 4 + n_pad * 4)
        logits_p = pl.pallas_call(
            kernel,
            out_shape=logits_shape,
            grid_spec=pltpu.PrefetchScalarGridSpec(
                num_scalar_prefetch=1,
                grid=grid,
                in_specs=[table_spec],
                out_specs=logits_spec),
            compiler_params=pltpu.CompilerParams(
                dimension_semantics=("parallel",),
                vmem_limit_bytes=32 * 1024 * 1024),
            cost_estimate=cost,
        )(idx_flat, table_p)
        logits = logits_p[:N, :V].reshape(B, T, V)
        return logits, None

    # Targets stay as a thin (N, 1) i32 VMEM column: the CE one-hot compare needs
    # them sublane-aligned against the (tile, Vp) lane iota.
    tgt_col = jnp.pad(targets.reshape(-1).astype(jnp.int32),
                      (0, n_pad - N)).reshape(n_pad, 1)

    kernel = functools.partial(_bigram_train_kernel,
                               tile_rows=tile_rows, n_valid=N)
    cost = pl.CostEstimate(
        flops=6 * n_pad * vp,
        transcendentals=n_pad * vp + n_pad,
        bytes_accessed=n_pad * vp * 4 + vr * vp * 4 + n_pad * 8 + 4)
    logits_p, loss = pl.pallas_call(
        kernel,
        out_shape=(logits_shape, jax.ShapeDtypeStruct((1, 1), jnp.float32)),
        grid_spec=pltpu.PrefetchScalarGridSpec(
            num_scalar_prefetch=1,
            grid=grid,
            in_specs=[
                pl.BlockSpec((tile_rows, 1), lambda i, idx_s: (i, 0)),
                table_spec,
            ],
            out_specs=(
                logits_spec,
                pl.BlockSpec((1, 1), lambda i, idx_s: (0, 0),
                             memory_space=pltpu.MemorySpace.SMEM),
            ),
            scratch_shapes=[pltpu.SMEM((1, 1), jnp.float32)]),
        compiler_params=pltpu.CompilerParams(
            # loss accumulates across the grid -> reduction axis.
            dimension_semantics=("arbitrary",),
            vmem_limit_bytes=32 * 1024 * 1024),
        cost_estimate=cost,
    )(idx_flat, tgt_col, table_p)

    logits = logits_p[:N, :V].reshape(B, T, V)
    return logits, loss[0, 0]


def _reference(idx, token_table, targets):
    B, T = idx.shape
    V = token_table.shape[0]
    ref_logits = jnp.take(token_table, idx, axis=0)
    flat = ref_logits.reshape(-1, V)
    lse = jax.nn.logsumexp(flat, axis=-1)
    picked = flat[jnp.arange(B * T), targets.reshape(-1)]
    return ref_logits, jnp.mean(lse - picked)


if __name__ == "__main__":
    # TODO(synk): BiagramModel.generate (torch.multinomial sampling loop) is not
    # part of forward() and is not implemented here.
    vocab_size = 65          # e.g. tiny-shakespeare char vocab
    B, T = 2, 8

    key = jax.random.PRNGKey(0)
    k_tab, k_idx, k_tgt = jax.random.split(key, 3)

    token_table = jax.random.normal(k_tab, (vocab_size, vocab_size), jnp.float32)
    idx = jax.random.randint(k_idx, (B, T), 0, vocab_size, jnp.int32)
    targets = jax.random.randint(k_tgt, (B, T), 0, vocab_size, jnp.int32)

    # Training path (logits + loss).
    logits, loss = bigram_forward(idx, token_table, targets)
    jax.block_until_ready((logits, loss))

    ref_logits, ref_loss = _reference(idx, token_table, targets)
    assert logits.shape == (B, T, vocab_size)
    assert jnp.allclose(logits, ref_logits, atol=1e-5), "logits mismatch"
    assert jnp.allclose(loss, ref_loss, atol=1e-5, rtol=1e-5), "loss mismatch"

    # Inference path (targets=None -> loss is None, like PyTorch).
    logits_only, loss_none = bigram_forward(idx, token_table, None)
    jax.block_until_ready(logits_only)
    assert loss_none is None
    assert jnp.allclose(logits_only, ref_logits, atol=1e-5), "infer logits mismatch"

    # Ragged case (N not a multiple of 8) exercises the padded-row loss mask.
    B2, T2 = 3, 5
    idx2 = jax.random.randint(k_idx, (B2, T2), 0, vocab_size, jnp.int32)
    tgt2 = jax.random.randint(k_tgt, (B2, T2), 0, vocab_size, jnp.int32)
    logits2, loss2 = bigram_forward(idx2, token_table, tgt2)
    jax.block_until_ready((logits2, loss2))
    ref_logits2, ref_loss2 = _reference(idx2, token_table, tgt2)
    assert jnp.allclose(logits2, ref_logits2, atol=1e-5), "ragged logits mismatch"
    assert jnp.allclose(loss2, ref_loss2, atol=1e-5, rtol=1e-5), "ragged loss mismatch"

    print("KERNEL_OK")
</pallas_src>

<mosaic_0001>
module attributes {stable_mosaic.version = 11 : i64} {
  func.func @_bigram_train_kernel(%arg0: i32, %arg1: memref<16xi32, #tpu.memory_space<smem>>, %arg2: memref<16x1xi32, #tpu.memory_space<vmem>>, %arg3: memref<72x128xf32, #tpu.memory_space<vmem>>, %arg4: memref<16x128xf32, #tpu.memory_space<vmem>>, %arg5: memref<1x1xf32, #tpu.memory_space<smem>>, %arg6: memref<1x1xf32, #tpu.memory_space<smem>>) attributes {dimension_semantics = [#tpu.dimension_semantics<arbitrary>], iteration_bounds = array<i64: 1>, scalar_prefetch = 1 : i64, scratch_operands = 1 : i64, tpu.core_type = #tpu.core_type<tc>, window_params = [{transform_indices = @transform_0, window_bounds = array<i64: 16, 1>}, {pipeline_mode = #tpu.pipeline_mode<synchronous>, transform_indices = @transform_1, window_bounds = array<i64: 72, 128>}, {transform_indices = @transform_2, window_bounds = array<i64: 16, 128>}, {transform_indices = @transform_3, window_bounds = array<i64: 1, 1>}]} {
    %c0_i32 = arith.constant 0 : i32
    %0 = arith.cmpi eq, %arg0, %c0_i32 : i32
    %1 = arith.extui %0 : i1 to i32
    %c0_i32_0 = arith.constant 0 : i32
    %2 = arith.cmpi ne, %1, %c0_i32_0 : i32
    scf.if %2 {
      %cst_16 = arith.constant 0.000000e+00 : f32
      %c0_17 = arith.constant 0 : index
      %c0_18 = arith.constant 0 : index
      %34 = memref.load %arg6[%c0_17, %c0_18] : memref<1x1xf32, #tpu.memory_space<smem>>
      memref.store %cst_16, %arg6[%c0_17, %c0_18] : memref<1x1xf32, #tpu.memory_space<smem>>
    } else {
    }
    %c16_i32 = arith.constant 16 : i32
    %3 = arith.muli %arg0, %c16_i32 : i32
    %c0_i32_1 = arith.constant 0 : i32
    %c2_i32 = arith.constant 2 : i32
    %4 = arith.addi %c0_i32_1, %c2_i32 : i32
    %c1_i32 = arith.constant 1 : i32
    scf.for %arg7 = %c0_i32_1 to %4 step %c1_i32  : i32 {
      %c8_i32 = arith.constant 8 : i32
      %34 = arith.muli %arg7, %c8_i32 : i32
      %35 = tpu.assume_multiple %34, 8 : i32
      %c0_i32_16 = arith.constant 0 : i32
      %36 = arith.addi %35, %c0_i32_16 : i32
      %37 = arith.addi %3, %36 : i32
      %38 = arith.index_cast %37 : i32 to index
      %39 = memref.load %arg1[%38] : memref<16xi32, #tpu.memory_space<smem>>
      %40 = arith.index_cast %39 : i32 to index
      %c0_17 = arith.constant 0 : index
      %41 = vector.load %arg3[%40, %c0_17] : memref<72x128xf32, #tpu.memory_space<vmem>>, vector<1x128xf32>
      %42 = arith.index_cast %36 : i32 to index
      %c0_18 = arith.constant 0 : index
      %43 = vector.load %arg4[%42, %c0_18] : memref<16x128xf32, #tpu.memory_space<vmem>>, vector<1x128xf32>
      tpu.vector_store %arg4[%42, %c0_18], %41 {strides = array<i32>} : memref<16x128xf32, #tpu.memory_space<vmem>>, vector<1x128xf32>,
      %c1_i32_19 = arith.constant 1 : i32
      %44 = arith.addi %35, %c1_i32_19 : i32
      %45 = arith.addi %3, %44 : i32
      %46 = arith.index_cast %45 : i32 to index
      %47 = memref.load %arg1[%46] : memref<16xi32, #tpu.memory_space<smem>>
      %48 = arith.index_cast %47 : i32 to index
      %c0_20 = arith.constant 0 : index
      %49 = vector.load %arg3[%48, %c0_20] : memref<72x128xf32, #tpu.memory_space<vmem>>, vector<1x128xf32>
      %50 = arith.index_cast %44 : i32 to index
      %c0_21 = arith.constant 0 : index
      %51 = vector.load %arg4[%50, %c0_21] : memref<16x128xf32, #tpu.memory_space<vmem>>, vector<1x128xf32>
      tpu.vector_store %arg4[%50, %c0_21], %49 {strides = array<i32>} : memref<16x128xf32, #tpu.memory_space<vmem>>, vector<1x128xf32>,
      %c2_i32_22 = arith.constant 2 : i32
      %52 = arith.addi %35, %c2_i32_22 : i32
      %53 = arith.addi %3, %52 : i32
      %54 = arith.index_cast %53 : i32 to index
      %55 = memref.load %arg1[%54] : memref<16xi32, #tpu.memory_space<smem>>
      %56 = arith.index_cast %55 : i32 to index
      %c0_23 = arith.constant 0 : index
      %57 = vector.load %arg3[%56, %c0_23] : memref<72x128xf32, #tpu.memory_space<vmem>>, vector<1x128xf32>
      %58 = arith.index_cast %52 : i32 to index
      %c0_24 = arith.constant 0 : index
      %59 = vector.load %arg4[%58, %c0_24] : memref<16x128xf32, #tpu.memory_space<vmem>>, vector<1x128xf32>
      tpu.vector_store %arg4[%58, %c0_24], %57 {strides = array<i32>} : memref<16x128xf32, #tpu.memory_space<vmem>>, vector<1x128xf32>,
      %c3_i32 = arith.constant 3 : i32
      %60 = arith.addi %35, %c3_i32 : i32
      %61 = arith.addi %3, %60 : i32
      %62 = arith.index_cast %61 : i32 to index
      %63 = memref.load %arg1[%62] : memref<16xi32, #tpu.memory_space<smem>>
      %64 = arith.index_cast %63 : i32 to index
      %c0_25 = arith.constant 0 : index
      %65 = vector.load %arg3[%64, %c0_25] : memref<72x128xf32, #tpu.memory_space<vmem>>, vector<1x128xf32>
      %66 = arith.index_cast %60 : i32 to index
      %c0_26 = arith.constant 0 : index
      %67 = vector.load %arg4[%66, %c0_26] : memref<16x128xf32, #tpu.memory_space<vmem>>, vector<1x128xf32>
      tpu.vector_store %arg4[%66, %c0_26], %65 {strides = array<i32>} : memref<16x128xf32, #tpu.memory_space<vmem>>, vector<1x128xf32>,
      %c4_i32 = arith.constant 4 : i32
      %68 = arith.addi %35, %c4_i32 : i32
      %69 = arith.addi %3, %68 : i32
      %70 = arith.index_cast %69 : i32 to index
      %71 = memref.load %arg1[%70] : memref<16xi32, #tpu.memory_space<smem>>
      %72 = arith.index_cast %71 : i32 to index
      %c0_27 = arith.constant 0 : index
      %73 = vector.load %arg3[%72, %c0_27] : memref<72x128xf32, #tpu.memory_space<vmem>>, vector<1x128xf32>
      %74 = arith.index_cast %68 : i32 to index
      %c0_28 = arith.constant 0 : index
      %75 = vector.load %arg4[%74, %c0_28] : memref<16x128xf32, #tpu.memory_space<vmem>>, vector<1x128xf32>
      tpu.vector_store %arg4[%74, %c0_28], %73 {strides = array<i32>} : memref<16x128xf32, #tpu.memory_space<vmem>>, vector<1x128xf32>,
      %c5_i32 = arith.constant 5 : i32
      %76 = arith.addi %35, %c5_i32 : i32
      %77 = arith.addi %3, %76 : i32
      %78 = arith.index_cast %77 : i32 to index
      %79 = memref.load %arg1[%78] : memref<16xi32, #tpu.memory_space<smem>>
      %80 = arith.index_cast %79 : i32 to index
      %c0_29 = arith.constant 0 : index
      %81 = vector.load %arg3[%80, %c0_29] : memref<72x128xf32, #tpu.memory_space<vmem>>, vector<1x128xf32>
      %82 = arith.index_cast %76 : i32 to index
      %c0_30 = arith.constant 0 : index
      %83 = vector.load %arg4[%82, %c0_30] : memref<16x128xf32, #tpu.memory_space<vmem>>, vector<1x128xf32>
      tpu.vector_store %arg4[%82, %c0_30], %81 {strides = array<i32>} : memref<16x128xf32, #tpu.memory_space<vmem>>, vector<1x128xf32>,
      %c6_i32 = arith.constant 6 : i32
      %84 = arith.addi %35, %c6_i32 : i32
      %85 = arith.addi %3, %84 : i32
      %86 = arith.index_cast %85 : i32 to index
      %87 = memref.load %arg1[%86] : memref<16xi32, #tpu.memory_space<smem>>
      %88 = arith.index_cast %87 : i32 to index
      %c0_31 = arith.constant 0 : index
      %89 = vector.load %arg3[%88, %c0_31] : memref<72x128xf32, #tpu.memory_space<vmem>>, vector<1x128xf32>
      %90 = arith.index_cast %84 : i32 to index
      %c0_32 = arith.constant 0 : index
      %91 = vector.load %arg4[%90, %c0_32] : memref<16x128xf32, #tpu.memory_space<vmem>>, vector<1x128xf32>
      tpu.vector_store %arg4[%90, %c0_32], %89 {strides = array<i32>} : memref<16x128xf32, #tpu.memory_space<vmem>>, vector<1x128xf32>,
      %c7_i32 = arith.constant 7 : i32
      %92 = arith.addi %35, %c7_i32 : i32
      %93 = arith.addi %3, %92 : i32
      %94 = arith.index_cast %93 : i32 to index
      %95 = memref.load %arg1[%94] : memref<16xi32, #tpu.memory_space<smem>>
      %96 = arith.index_cast %95 : i32 to index
      %c0_33 = arith.constant 0 : index
      %97 = vector.load %arg3[%96, %c0_33] : memref<72x128xf32, #tpu.memory_space<vmem>>, vector<1x128xf32>
      %98 = arith.index_cast %92 : i32 to index
      %c0_34 = arith.constant 0 : index
      %99 = vector.load %arg4[%98, %c0_34] : memref<16x128xf32, #tpu.memory_space<vmem>>, vector<1x128xf32>
      tpu.vector_store %arg4[%98, %c0_34], %97 {strides = array<i32>} : memref<16x128xf32, #tpu.memory_space<vmem>>, vector<1x128xf32>,
    }
    %c2_i32_2 = arith.constant 2 : i32
    %c0 = arith.constant 0 : index
    %c0_3 = arith.constant 0 : index
    %5 = vector.load %arg4[%c0, %c0_3] : memref<16x128xf32, #tpu.memory_space<vmem>>, vector<16x128xf32>
    %cst = arith.constant dense<0xFF800000> : vector<16xf32>
    %6 = vector.multi_reduction <maximumf>, %5, %cst [1] : vector<16x128xf32> to vector<16xf32>
    %7 = vector.shape_cast %6 : vector<16xf32> to vector<16x1xf32>
    %8 = vector.broadcast %7 : vector<16x1xf32> to vector<16x128xf32>
    %9 = arith.subf %5, %8 : vector<16x128xf32>
    %10 = math.exp %9 : vector<16x128xf32>
    %cst_4 = arith.constant dense<0.000000e+00> : vector<16xf32>
    %11 = vector.multi_reduction <add>, %10, %cst_4 [1] : vector<16x128xf32> to vector<16xf32>
    %12 = vector.shape_cast %11 : vector<16xf32> to vector<16x1xf32>
    %13 = math.log %12 : vector<16x1xf32>
    %14 = arith.addf %7, %13 : vector<16x1xf32>
    %15 = tpu.iota {dimensions = array<i32: 1>} : vector<16x128xi32>
    %c0_5 = arith.constant 0 : index
    %c0_6 = arith.constant 0 : index
    %16 = vector.load %arg2[%c0_5, %c0_6] : memref<16x1xi32, #tpu.memory_space<vmem>>, vector<16x1xi32>
    %17 = vector.broadcast %16 : vector<16x1xi32> to vector<16x128xi32>
    %18 = arith.cmpi eq, %15, %17 : vector<16x128xi32>
    %cst_7 = arith.constant 0.000000e+00 : f32
    %19 = vector.broadcast %cst_7 : f32 to vector<16x128xf32>
    %20 = arith.select %18, %5, %19 : vector<16x128xi1>, vector<16x128xf32>
    %cst_8 = arith.constant dense<0.000000e+00> : vector<16xf32>
    %21 = vector.multi_reduction <add>, %20, %cst_8 [1] : vector<16x128xf32> to vector<16xf32>
    %22 = vector.shape_cast %21 : vector<16xf32> to vector<16x1xf32>
    %23 = arith.subf %14, %22 : vector<16x1xf32>
    %c0_9 = arith.constant 0 : index
    %c0_10 = arith.constant 0 : index
    %24 = memref.load %arg6[%c0_9, %c0_10] : memref<1x1xf32, #tpu.memory_space<smem>>
    %25 = vector.shape_cast %23 : vector<16x1xf32> to vector<1x16x1xf32>
    %cst_11 = arith.constant dense<0.000000e+00> : vector<1xf32>
    %26 = vector.multi_reduction <add>, %25, %cst_11 [1, 2] : vector<1x16x1xf32> to vector<1xf32>
    %27 = vector.shape_cast %26 : vector<1xf32> to vector<1x1x1xf32>
    %28 = vector.extract %27[0, 0, 0] : f32 from vector<1x1x1xf32>
    %29 = arith.addf %24, %28 : f32
    %c0_12 = arith.constant 0 : index
    %c0_13 = arith.constant 0 : index
    %30 = memref.load %arg6[%c0_12, %c0_13] : memref<1x1xf32, #tpu.memory_space<smem>>
    memref.store %29, %arg6[%c0_12, %c0_13] : memref<1x1xf32, #tpu.memory_space<smem>>
    %c0_i32_14 = arith.constant 0 : i32
    %31 = arith.cmpi eq, %arg0, %c0_i32_14 : i32
    %32 = arith.extui %31 : i1 to i32
    %c0_i32_15 = arith.constant 0 : i32
    %33 = arith.cmpi ne, %32, %c0_i32_15 : i32
    scf.if %33 {
      %c0_16 = arith.constant 0 : index
      %c0_17 = arith.constant 0 : index
      %34 = memref.load %arg6[%c0_16, %c0_17] : memref<1x1xf32, #tpu.memory_space<smem>>
      %cst_18 = arith.constant 6.250000e-02 : f32
      %35 = arith.mulf %34, %cst_18 : f32
      %c0_19 = arith.constant 0 : index
      %c0_20 = arith.constant 0 : index
      %36 = memref.load %arg5[%c0_19, %c0_20] : memref<1x1xf32, #tpu.memory_space<smem>>
      memref.store %35, %arg5[%c0_19, %c0_20] : memref<1x1xf32, #tpu.memory_space<smem>>
    } else {
    }
    return
  }
  func.func @transform_0(%arg0: i32, %arg1: memref<16xi32, #tpu.memory_space<smem>>) -> (i32, i32) {
    %c0_i32 = arith.constant 0 : i32
    %c0_i32_0 = arith.constant 0 : i32
    return %arg0, %c0_i32 : i32, i32
  }
  func.func @transform_1(%arg0: i32, %arg1: memref<16xi32, #tpu.memory_space<smem>>) -> (i32, i32) {
    %c0_i32 = arith.constant 0 : i32
    %c0_i32_0 = arith.constant 0 : i32
    %c0_i32_1 = arith.constant 0 : i32
    return %c0_i32, %c0_i32_0 : i32, i32
  }
  func.func @transform_2(%arg0: i32, %arg1: memref<16xi32, #tpu.memory_space<smem>>) -> (i32, i32) {
    %c0_i32 = arith.constant 0 : i32
    %c0_i32_0 = arith.constant 0 : i32
    return %arg0, %c0_i32 : i32, i32
  }
  func.func @transform_3(%arg0: i32, %arg1: memref<16xi32, #tpu.memory_space<smem>>) -> (i32, i32) {
    %c0_i32 = arith.constant 0 : i32
    %c0_i32_0 = arith.constant 0 : i32
    %c0_i32_1 = arith.constant 0 : i32
    return %c0_i32, %c0_i32_0 : i32, i32
  }
}

</mosaic_0001>

<llo_original>
// kernel: tpu_custom_call.1
$region0: #{tpu_custom_call.1}
  #allocation0 [shape = 'u32[]', space=smem, size = 0x4, offset = 0x4, fixed_abs, tag = 'smem constant byte address 0x4 - core index']
  #allocation1 [shape = 'u32[144,128]{1,0:T(1,128)}', space=vmem, size = 0x12000, scoped, tag = 'internal scratch']
  #allocation2 [shape = 'f32[1,1]{1,0:T(1,128)}', space=smem, size = 0x200, scoped, tag = 'scratch operand']
  #allocation3 [shape = 's32[1]{0}', space=sflag, size = 0x4, scoped, tag = 'scoped memory for tpu_custom_call.1']
  #allocation4 [shape = 'u8[512]{0}', space=smem, size = 0x200, scoped, tag = 'prefetched SMEM operand 0']
  %s0 = inlined_call_operand.vmem [shape: s32[16], index: 0, kind: input, shape index: {}]
  %s1 = inlined_call_operand.vmem [shape: s32[16,1], index: 1, kind: input, shape index: {}]
  %s2 = inlined_call_operand.hbm [shape: f32[72,128], index: 2, kind: input, shape index: {}]
  %s3 = inlined_call_operand.hbm [shape: f32[16,128], index: 3, kind: output, shape index: {0}]
  %s4 = inlined_call_operand.hbm [shape: f32[1,1], index: 4, kind: output, shape index: {1}]
  %5 = xla_tuple %s3, %s4
  %s6 = sld [smem:[#allocation0]]
  $region45: #{tpu_custom_call.1} parent=0
    _
  %s8 = ssub.s32 1, %s6
  %s9 = scalar_select 0, %s8, %s6
  %s10 = sshll.u32 %s0, 4
  %s11 = int_to_ptr.vmem [resolvable:$true] %s10
  %13 = dma.vmem_to_smem %s11, 16, [#allocation4], [#allocation3]
  %14 = dma.done [#allocation3], 16
  %15 = sfence
  $region1: #{tpu_custom_call.1} parent=0
    #allocation5 [shape = 'u8[36864]{0}', space=vmem, size = 0x9000, scoped, tag = 'input window, operand 2, single buffered']
    #allocation6 [shape = 's32[1]{0}', space=sflag, size = 0x4, scoped, tag = 'scoped memory for tpu_custom_call.1']
    #allocation7 [shape = 's32[1]{0}', space=sflag, size = 0x4, scoped, tag = 'scoped memory for tpu_custom_call.1']
    #allocation8 [shape = 's32[1]{0}', space=sflag, size = 0x4, scoped, tag = 'scoped memory for tpu_custom_call.1']
    #allocation9 [shape = 'u8[8192]{0}', space=vmem, size = 0x2000, scoped, tag = 'output window, operand 0, single buffered']
    #allocation10 [shape = 'u8[512]{0}', space=smem, size = 0x200, scoped, tag = 'output window, operand 1, single buffered']
    %16 = vsyncpa [#allocation6], 0
    %17 = vsyncpa [#allocation7], 0
    %18 = vsyncpa [#allocation8], 0
    // Predicated region
    $region2: #{tpu_custom_call.1} parent=1 // pred_check
      _
    $region3: #{tpu_custom_call.1} parent=1 // pred_check_branch
      %20 = sbr.rel (0) target = $region5
    $region4: #{tpu_custom_call.1} parent=1 // pred_region
      _
    $region5: #{tpu_custom_call.1} parent=1 // pred_fallthru
      _
    // Predicated region
    $region6: #{tpu_custom_call.1} parent=1 // pred_check
      _
    $region7: #{tpu_custom_call.1} parent=1 // pred_check_branch
      %22 = sbr.rel (0) target = $region9
    $region8: #{tpu_custom_call.1} parent=1 // pred_region
      %s24 = ssub.s32 1152, 1152
      %25 = vsyncadd [#allocation6], %s24
      %s26 = sshll.u32 [#allocation5], 4
      %s27 = int_to_ptr.vmem [resolvable:$true] %s26
      %32 = dma.hbm_to_vmem [thread:$0]  %s2, 1152, %s27, [#allocation6], 128, 128, 8
    $region9: #{tpu_custom_call.1} parent=1 // pred_fallthru
      _
    // Predicated region
    $region10: #{tpu_custom_call.1} parent=1 // pred_check
      _
    $region11: #{tpu_custom_call.1} parent=1 // pred_check_branch
      %34 = sbr.rel (0) target = $region13
    $region12: #{tpu_custom_call.1} parent=1 // pred_region
      %35 = dma.done [#allocation6], 1152
    $region13: #{tpu_custom_call.1} parent=1 // pred_fallthru
      _
    %p36 = scmp.eq.s32.totalorder 0, 0
    // Predicated region
    $region14: #{tpu_custom_call.1} parent=1 // pred_check
      %p37 = pneg %p36
    $region15: #{tpu_custom_call.1} parent=1 // pred_check_branch
      %39 = sbr.rel (%p37) target = $region17
    $region16: #{tpu_custom_call.1} parent=1 // pred_region
      %s40 = scalar_lea.smem [#allocation2], 0
      %41 = sst [smem:[%s40]] 0.0
    $region17: #{tpu_custom_call.1} parent=1 // pred_fallthru
      _
    %s42 = smul.u32 0, 16
    loop: start=0, step=1, limit=2
    $region18: #{tpu_custom_call.1} parent=1 // loop_pre_header
      _
    $region19: #{tpu_custom_call.1} parent=1 // loop_header
      %s44 = sphi 0, %s48
      %p45 = scmp.ge.s32.totalorder %s44, 2
    $region20: #{tpu_custom_call.1} parent=1 // loop_header_branch
      %47 = sbr.rel (%p45) target = $region24
    $region21: #{tpu_custom_call.1} parent=1 // loop_body
      %s49 = smul.u32 %s44, 8
      %s50 = sadd.s32 %s42, %s49
      %s51 = sld [smem:[#allocation4 + %s50]]
      %s52 = scalar_lea.vmem [#allocation5], %s51
      %v53 = vld [vmem:[%s52] sm:$0x1]
      %s54 = scalar_lea.vmem [#allocation9], %s49
      %55 = vst [vmem:[%s54] sm:$0x1] %v53
      %s56 = sadd.s32 %s49, 1
      %s57 = sadd.s32 %s42, %s56
      %s58 = sld [smem:[#allocation4 + %s57]]
      %s59 = scalar_lea.vmem [#allocation5], %s58
      %v60 = vld [vmem:[%s59] sm:$0x1]
      %s61 = scalar_lea.vmem [#allocation9], %s56
      %62 = vst [vmem:[%s61] sm:$0x1] %v60
      %s63 = sadd.s32 %s49, 2
      %s64 = sadd.s32 %s42, %s63
      %s65 = sld [smem:[#allocation4 + %s64]]
      %s66 = scalar_lea.vmem [#allocation5], %s65
      %v67 = vld [vmem:[%s66] sm:$0x1]
      %s68 = scalar_lea.vmem [#allocation9], %s63
      %69 = vst [vmem:[%s68] sm:$0x1] %v67
      %s70 = sadd.s32 %s49, 3
      %s71 = sadd.s32 %s42, %s70
      %s72 = sld [smem:[#allocation4 + %s71]]
      %s73 = scalar_lea.vmem [#allocation5], %s72
      %v74 = vld [vmem:[%s73] sm:$0x1]
      %s75 = scalar_lea.vmem [#allocation9], %s70
      %76 = vst [vmem:[%s75] sm:$0x1] %v74
      %s77 = sadd.s32 %s49, 4
      %s78 = sadd.s32 %s42, %s77
      %s79 = sld [smem:[#allocation4 + %s78]]
      %s80 = scalar_lea.vmem [#allocation5], %s79
      %v81 = vld [vmem:[%s80] sm:$0x1]
      %s82 = scalar_lea.vmem [#allocation9], %s77
      %83 = vst [vmem:[%s82] sm:$0x1] %v81
      %s84 = sadd.s32 %s49, 5
      %s85 = sadd.s32 %s42, %s84
      %s86 = sld [smem:[#allocation4 + %s85]]
      %s87 = scalar_lea.vmem [#allocation5], %s86
      %v88 = vld [vmem:[%s87] sm:$0x1]
      %s89 = scalar_lea.vmem [#allocation9], %s84
      %90 = vst [vmem:[%s89] sm:$0x1] %v88
      %s91 = sadd.s32 %s49, 6
      %s92 = sadd.s32 %s42, %s91
      %s93 = sld [smem:[#allocation4 + %s92]]
      %s94 = scalar_lea.vmem [#allocation5], %s93
      %v95 = vld [vmem:[%s94] sm:$0x1]
      %s96 = scalar_lea.vmem [#allocation9], %s91
      %97 = vst [vmem:[%s96] sm:$0x1] %v95
      %s98 = sadd.s32 %s49, 7
      %s99 = sadd.s32 %s42, %s98
      %s100 = sld [smem:[#allocation4 + %s99]]
      %s101 = scalar_lea.vmem [#allocation5], %s100
      %v102 = vld [vmem:[%s101] sm:$0x1]
      %s103 = scalar_lea.vmem [#allocation9], %s98
      %104 = vst [vmem:[%s103] sm:$0x1] %v102
    $region22: #{tpu_custom_call.1} parent=1 // loop_footer
      %s48 = sadd.s32 1, %s44
    $region23: #{tpu_custom_call.1} parent=1 // loop_footer_branch
      %43 = sbr.rel target = $region19
    $region24: #{tpu_custom_call.1} parent=1 // loop_exit
      _
    %v105 = vld [vmem:[#allocation9] sm:$0xff]
    %v106 = vld [vmem:[#allocation9 + $0x8] sm:$0xff]
    %107 = vmax.xlane.f32.xlu0 %v105
    %v108 = vpop.xlane.xlu0 %107
    %109 = vmax.xlane.f32.xlu0 %v106
    %v110 = vpop.xlane.xlu0 %109
    %v111 = vsub.f32 %v105, %v108
    %v112 = vsub.f32 %v106, %v110
    %v113 = vmul.f32 %v111, 1.442695
    %v114 = vpow.pop %v113
    %v115 = vmul.f32 %v112, 1.442695
    %v116 = vpow.pop %v115
    %117 = vadd.xlane.f32.xlu0 %v114
    %v118 = vpop.xlane.xlu0 %117
    %119 = vadd.xlane.f32.xlu0 %v116
    %v120 = vpop.xlane.xlu0 %119
    %v121 = vlog2.pop %v118
    %v122 = vmul.f32 %v121, 0.6931472
    %v123 = vlog2.pop %v120
    %v124 = vmul.f32 %v123, 0.6931472
    %v125 = vadd.f32 %v108, %v122
    %v126 = vadd.f32 %v110, %v124
    %v127 = vlaneseq
    %v128 = vand.u32 %v127, 127
    %v129 = vld [vmem:[%s1] sm:$0xff]
    %v130 = vld [vmem:[%s1 + $0x8] sm:$0xff]
    %131 = vset.pattern.permute.xlu0 0
    %132 = vperm.xlu0 %131, %v129
    %v133 = vpop.permute.xlu0 %132
    %134 = vset.pattern.permute.xlu0 0
    %135 = vperm.xlu0 %134, %v130
    %v136 = vpop.permute.xlu0 %135
    %vm137 = vcmp.eq.s32.totalorder %v128, %v133
    %vm138 = vcmp.eq.s32.totalorder %v128, %v136
    %v139 = vsel %vm137, %v105, 0.0
    %v140 = vsel %vm138, %v106, 0.0
    %141 = vadd.xlane.f32.xlu0 %v139
    %v142 = vpop.xlane.xlu0 %141
    %143 = vadd.xlane.f32.xlu0 %v140
    %v144 = vpop.xlane.xlu0 %143
    %v145 = vsub.f32 %v125, %v142
    %v146 = vsub.f32 %v126, %v144
    %s147 = sld [smem:[#allocation2]]
    %vm148 = vcmask 7168
    %v149 = vsel %vm148, %v145, 0.0
    %v150 = vsel %vm148, %v146, 0.0
    %v151 = vadd.f32 %v149, %v150
    %152 = vadd.xlane.f32.xlu0 %v151
    %v153 = vpop.xlane.xlu0 %152
    %v154 = vrot.slane %v153, 4
    %v155 = vadd.f32 %v153, %v154
    %v156 = vrot.slane %v155, 2
    %v157 = vadd.f32 %v155, %v156
    %v158 = vrot.slane %v157, 1
    %v159 = vadd.f32 %v157, %v158
    %s160 = vtos %v159
    %s161 = sadd.f32 %s147, %s160
    %s162 = scalar_lea.smem [#allocation2], 0
    %163 = sst [smem:[%s162]] %s161
    // Predicated region
    $region25: #{tpu_custom_call.1} parent=1 // pred_check
      %p164 = pneg %p36
    $region26: #{tpu_custom_call.1} parent=1 // pred_check_branch
      %166 = sbr.rel (%p164) target = $region28
    $region27: #{tpu_custom_call.1} parent=1 // pred_region
      %s167 = sld [smem:[#allocation2]]
      %s168 = smul.f32 %s167, 0.0625
      %s169 = scalar_lea.smem [#allocation10], 0
      %170 = sst [smem:[%s169]] %s168
    $region28: #{tpu_custom_call.1} parent=1 // pred_fallthru
      _
    // Predicated region
    $region29: #{tpu_custom_call.1} parent=1 // pred_check
      _
    $region30: #{tpu_custom_call.1} parent=1 // pred_check_branch
      %172 = sbr.rel (0) target = $region32
    $region31: #{tpu_custom_call.1} parent=1 // pred_region
      %s174 = ssub.s32 256, 256
      %175 = vsyncadd [#allocation7], %s174
      %s176 = sshll.u32 [#allocation9], 4
      %s177 = int_to_ptr.vmem [resolvable:$true] %s176
      %182 = dma.vmem_to_hbm [thread:$0]  %s177, 256, %s3, [#allocation7], 128, 128, 8
    $region32: #{tpu_custom_call.1} parent=1 // pred_fallthru
      _
    // Predicated region
    $region33: #{tpu_custom_call.1} parent=1 // pred_check
      _
    $region34: #{tpu_custom_call.1} parent=1 // pred_check_branch
      %184 = sbr.rel (0) target = $region36
    $region35: #{tpu_custom_call.1} parent=1 // pred_region
      %s186 = ssub.s32 16, 16
      %187 = vsyncadd [#allocation8], %s186
      %190 = dma.smem_to_hbm [#allocation10], 16, %s4, [#allocation8]
    $region36: #{tpu_custom_call.1} parent=1 // pred_fallthru
      _
    // Predicated region
    $region37: #{tpu_custom_call.1} parent=1 // pred_check
      _
    $region38: #{tpu_custom_call.1} parent=1 // pred_check_branch
      %192 = sbr.rel (0) target = $region40
    $region39: #{tpu_custom_call.1} parent=1 // pred_region
      %193 = dma.done [#allocation7], 256
    $region40: #{tpu_custom_call.1} parent=1 // pred_fallthru
      _
    // Predicated region
    $region41: #{tpu_custom_call.1} parent=1 // pred_check
      _
    $region42: #{tpu_custom_call.1} parent=1 // pred_check_branch
      %195 = sbr.rel (0) target = $region44
    $region43: #{tpu_custom_call.1} parent=1 // pred_region
      %196 = dma.done [#allocation8], 16
    $region44: #{tpu_custom_call.1} parent=1 // pred_fallthru
      _
    %197 = sfence
    %198 = vsyncpa [#allocation6], 1
    %199 = vsyncpa [#allocation7], 1
    %200 = vsyncpa [#allocation8], 1

</llo_original>
